<compile_context>
chip_gen: v7x
topology: tpu7x:2x2x1
jax: 0.10.0
libtpu: 0.0.40
codegen_flags: <defaults>
</compile_context>

<pallas_src>
import functools
import math

import jax
import jax.numpy as jnp
from jax.experimental import pallas as pl
from jax.experimental.pallas import tpu as pltpu


def _cdiv(a: int, b: int) -> int:
    return -(-a // b)


def _round_up(a: int, b: int) -> int:
    return _cdiv(a, b) * b


def _pe_combine_kernel(sf_ref, cf_ref, sc_ref, cc_ref, o_ref):
    """out[q, f, :] = sin(coarse_q + fine_f) via the angle-addition identity.

    sf/cf : (FINE, W)    sin/cos of fine angles  (constant block -> resident)
    sc/cc : (cpt, 1, W)  sin/cos of coarse angles for this tile
    o     : (cpt, FINE, W)
    Pure broadcast FMA (2 mul + 1 add / element); no transcendentals.
    """
    o_ref[...] = sc_ref[...] * cf_ref[...] + cc_ref[...] * sf_ref[...]


def _tile_target_bytes() -> int:
    """Generation-aware output-tile budget (per review: ~6 MiB v5e, ~12 MiB v6e/v7x)."""
    try:
        kind = jax.devices()[0].device_kind.lower()
    except Exception:
        kind = ""
    if "v5 lite" in kind or "v5lite" in kind or "v5e" in kind:
        return 6 << 20
    return 12 << 20


@functools.lru_cache(maxsize=None)
def _pe_table(seq_len: int, dim: int) -> jax.Array:
    """Builds pe[:, :seq_len] of shape (1, seq_len, dim), float32."""
    # ---- lane-dense packing: `group` consecutive positions per output row ----
    if dim % 128 == 0:
        group = 1                                   # already lane-dense
    else:
        group = math.lcm(dim, 128) // dim
        if group * dim > 4096:                      # cap row width for exotic dims
            group = 1                               # fall back (masked stores)
    W = group * dim
    rows = _cdiv(seq_len, group)                    # packed rows needed

    # ---- fine/coarse split of the angle (re-seeded exactly every FINE rows) ----
    tile_target = _tile_target_bytes()
    FINE = min(64, _round_up(rows, 8))              # multiple of 8 (sublane tile)
    while FINE > 8 and FINE * W * 4 > tile_target:  # keep one chunk <= tile budget
        FINE = max(8, (FINE // 2) // 8 * 8)
    n_coarse_needed = _cdiv(rows, FINE)

    # ---- chunks per grid step (output tile = cpt * FINE rows) ----
    chunk_bytes = FINE * W * 4
    cpt = max(1, min(tile_target // chunk_bytes, n_coarse_needed))
    total_bytes = n_coarse_needed * chunk_bytes
    if total_bytes > (2 << 20):
        # ensure >=2 (prefer 4) grid steps so v7x megacore uses both TensorCores
        min_tiles = max(2, min(4, n_coarse_needed))
        while _cdiv(n_coarse_needed, cpt) < min_tiles and cpt > 1:
            cpt //= 2
    grid_r = _cdiv(n_coarse_needed, cpt)
    n_coarse = grid_r * cpt                         # pad so tiles divide evenly
    # rows_alloc = n_coarse * FINE >= rows; extra rows are sliced off below.

    # ---- host-side (XLA) precompute of the tiny trig tables ----------------
    lane = jnp.arange(W, dtype=jnp.int32)
    col = lane % dim
    k = (col // 2).astype(jnp.float32)
    inv_freq = jnp.exp(k * jnp.float32(-2.0 * math.log(10000.0) / dim))   # (W,)
    phase = (col % 2).astype(jnp.float32) * jnp.float32(math.pi / 2.0)    # cos on odd cols
    pos_in_row = (lane // dim).astype(jnp.float32)
    a = jnp.float32(group) * inv_freq               # d(angle)/d(packed row)
    b = pos_in_row * inv_freq + phase               # per-lane offset (incl. phase)

    f = jnp.arange(FINE, dtype=jnp.float32)[:, None]            # (FINE, 1)
    fine_ang = f * a[None, :] + b[None, :]                      # (FINE, W)
    sf = jnp.sin(fine_ang)
    cf = jnp.cos(fine_ang)

    q = (jnp.arange(n_coarse, dtype=jnp.float32) * jnp.float32(FINE))[:, None]
    coarse_ang = q * a[None, :]                                 # (n_coarse, W)
    sc = jnp.sin(coarse_ang)[:, None, :]                        # (n_coarse, 1, W)
    cc = jnp.cos(coarse_ang)[:, None, :]

    # ---- VMEM budget: double-buffered output tile + resident fine tables ----
    out_tile_bytes = cpt * chunk_bytes
    vmem_limit = int(min(2 * out_tile_bytes          # double-buffered output
                         + 2 * FINE * W * 4          # resident fine tables
                         + 4 * cpt * W * 4           # double-buffered coarse rows
                         + (2 << 20),                # headroom
                         48 << 20))

    table = pl.pallas_call(
        _pe_combine_kernel,
        out_shape=jax.ShapeDtypeStruct((n_coarse, FINE, W), jnp.float32),
        grid_spec=pltpu.PrefetchScalarGridSpec(
            num_scalar_prefetch=0,
            grid=(grid_r,),
            in_specs=[
                pl.BlockSpec((FINE, W), lambda i: (0, 0)),        # sf (resident)
                pl.BlockSpec((FINE, W), lambda i: (0, 0)),        # cf (resident)
                pl.BlockSpec((cpt, 1, W), lambda i: (i, 0, 0)),   # sc
                pl.BlockSpec((cpt, 1, W), lambda i: (i, 0, 0)),   # cc
            ],
            out_specs=pl.BlockSpec((cpt, FINE, W), lambda i: (i, 0, 0)),
        ),
        compiler_params=pltpu.CompilerParams(
            dimension_semantics=("parallel",),
            vmem_limit_bytes=vmem_limit,
        ),
        cost_estimate=pl.CostEstimate(
            flops=3 * n_coarse * FINE * W,
            transcendentals=0,
            bytes_accessed=4 * (n_coarse * FINE * W + 2 * FINE * W + 2 * n_coarse * W),
        ),
    )(sf, cf, sc, cc)

    # Unpack: (n_coarse, FINE, W) -> packed rows -> positions, then slice.
    # (Reshape is free: layout is already position-major within each row.)
    pe = table.reshape(n_coarse * FINE * group, dim)[:seq_len]
    # Keep float32 to match the PyTorch buffer exactly (bf16 output would halve
    # HBM writes on v5e but changes the module's dtype contract).
    return pe[None, :, :]                           # (1, seq_len, dim)


def sinusoidal_positional_embedding(x: jax.Array, dim: int) -> jax.Array:
    """Mirrors SinusoidalPositionalEmbedding(dim).forward(x): pe[:, :seq_len]."""
    return _pe_table(int(x.shape[1]), int(dim))


def _reference(seq_len: int, dim: int) -> jnp.ndarray:
    # Pure-JAX reference replicating the PyTorch buffer construction.
    position = jnp.arange(seq_len, dtype=jnp.float32)[:, None]
    div_term = jnp.exp(
        jnp.arange(0, dim, 2, dtype=jnp.float32) * (-math.log(10000.0) / dim)
    )
    pe = jnp.zeros((seq_len, dim), jnp.float32)
    pe = pe.at[:, 0::2].set(jnp.sin(position * div_term))
    pe = pe.at[:, 1::2].set(jnp.cos(position * div_term))
    return pe[None]


if __name__ == "__main__":
    # Config 1: dim < 128 -> lcm lane-packing path (group = 4, W = 128).
    batch, seq_len, dim = 2, 8, 32
    key = jax.random.PRNGKey(0)
    x = jax.random.normal(key, (batch, seq_len, dim), dtype=jnp.float32)

    out = jax.block_until_ready(sinusoidal_positional_embedding(x, dim))
    ref = _reference(seq_len, dim)
    assert out.shape == (1, seq_len, dim), out.shape
    assert out.dtype == jnp.float32, out.dtype
    assert jnp.allclose(out, ref, atol=1e-5, rtol=1e-5), "mismatch (packed path)"

    # Config 2: dim % 128 == 0 -> natural lane-dense path (group = 1).
    seq2, dim2 = 24, 128
    x2 = jax.random.normal(key, (batch, seq2, dim2), dtype=jnp.float32)
    out2 = jax.block_until_ready(sinusoidal_positional_embedding(x2, dim2))
    assert out2.shape == (1, seq2, dim2), out2.shape
    assert jnp.allclose(out2, _reference(seq2, dim2), atol=1e-5, rtol=1e-5), \
        "mismatch (group==1 path)"

    print("KERNEL_OK")
</pallas_src>

<mosaic_0001>
module attributes {stable_mosaic.version = 11 : i64} {
  func.func @_pe_combine_kernel(%arg0: i32, %arg1: memref<8x128xf32, #tpu.memory_space<vmem>>, %arg2: memref<8x128xf32, #tpu.memory_space<vmem>>, %arg3: memref<1x1x128xf32, #tpu.memory_space<vmem>>, %arg4: memref<1x1x128xf32, #tpu.memory_space<vmem>>, %arg5: memref<1x8x128xf32, #tpu.memory_space<vmem>>) attributes {dimension_semantics = [#tpu.dimension_semantics<parallel>], iteration_bounds = array<i64: 1>, scalar_prefetch = 0 : i64, scratch_operands = 0 : i64, tpu.core_type = #tpu.core_type<tc>, window_params = [{pipeline_mode = #tpu.pipeline_mode<synchronous>, transform_indices = @transform_0, window_bounds = array<i64: 8, 128>}, {pipeline_mode = #tpu.pipeline_mode<synchronous>, transform_indices = @transform_1, window_bounds = array<i64: 8, 128>}, {transform_indices = @transform_2, window_bounds = array<i64: 1, 1, 128>}, {transform_indices = @transform_3, window_bounds = array<i64: 1, 1, 128>}, {transform_indices = @transform_4, window_bounds = array<i64: 1, 8, 128>}]} {
    %c0 = arith.constant 0 : index
    %c0_0 = arith.constant 0 : index
    %c0_1 = arith.constant 0 : index
    %0 = vector.load %arg3[%c0, %c0_0, %c0_1] : memref<1x1x128xf32, #tpu.memory_space<vmem>>, vector<1x1x128xf32>
    %c0_2 = arith.constant 0 : index
    %c0_3 = arith.constant 0 : index
    %1 = vector.load %arg2[%c0_2, %c0_3] : memref<8x128xf32, #tpu.memory_space<vmem>>, vector<8x128xf32>
    %2 = vector.shape_cast %1 : vector<8x128xf32> to vector<1x8x128xf32>
    %3 = vector.broadcast %0 : vector<1x1x128xf32> to vector<1x8x128xf32>
    %4 = arith.mulf %3, %2 : vector<1x8x128xf32>
    %c0_4 = arith.constant 0 : index
    %c0_5 = arith.constant 0 : index
    %c0_6 = arith.constant 0 : index
    %5 = vector.load %arg4[%c0_4, %c0_5, %c0_6] : memref<1x1x128xf32, #tpu.memory_space<vmem>>, vector<1x1x128xf32>
    %c0_7 = arith.constant 0 : index
    %c0_8 = arith.constant 0 : index
    %6 = vector.load %arg1[%c0_7, %c0_8] : memref<8x128xf32, #tpu.memory_space<vmem>>, vector<8x128xf32>
    %7 = vector.shape_cast %6 : vector<8x128xf32> to vector<1x8x128xf32>
    %8 = vector.broadcast %5 : vector<1x1x128xf32> to vector<1x8x128xf32>
    %9 = arith.mulf %8, %7 : vector<1x8x128xf32>
    %10 = arith.addf %4, %9 : vector<1x8x128xf32>
    %c0_9 = arith.constant 0 : index
    %c0_10 = arith.constant 0 : index
    %c0_11 = arith.constant 0 : index
    %11 = vector.load %arg5[%c0_9, %c0_10, %c0_11] : memref<1x8x128xf32, #tpu.memory_space<vmem>>, vector<1x8x128xf32>
    tpu.vector_store %arg5[%c0_9, %c0_10, %c0_11], %10 {strides = array<i32>} : memref<1x8x128xf32, #tpu.memory_space<vmem>>, vector<1x8x128xf32>,
    return
  }
  func.func @transform_0(%arg0: i32) -> (i32, i32) {
    %c0_i32 = arith.constant 0 : i32
    %c0_i32_0 = arith.constant 0 : i32
    %c0_i32_1 = arith.constant 0 : i32
    return %c0_i32, %c0_i32_0 : i32, i32
  }
  func.func @transform_1(%arg0: i32) -> (i32, i32) {
    %c0_i32 = arith.constant 0 : i32
    %c0_i32_0 = arith.constant 0 : i32
    %c0_i32_1 = arith.constant 0 : i32
    return %c0_i32, %c0_i32_0 : i32, i32
  }
  func.func @transform_2(%arg0: i32) -> (i32, i32, i32) {
    %c0_i32 = arith.constant 0 : i32
    %c0_i32_0 = arith.constant 0 : i32
    %c0_i32_1 = arith.constant 0 : i32
    return %arg0, %c0_i32, %c0_i32_0 : i32, i32, i32
  }
  func.func @transform_3(%arg0: i32) -> (i32, i32, i32) {
    %c0_i32 = arith.constant 0 : i32
    %c0_i32_0 = arith.constant 0 : i32
    %c0_i32_1 = arith.constant 0 : i32
    return %arg0, %c0_i32, %c0_i32_0 : i32, i32, i32
  }
  func.func @transform_4(%arg0: i32) -> (i32, i32, i32) {
    %c0_i32 = arith.constant 0 : i32
    %c0_i32_0 = arith.constant 0 : i32
    %c0_i32_1 = arith.constant 0 : i32
    return %arg0, %c0_i32, %c0_i32_0 : i32, i32, i32
  }
}

</mosaic_0001>

<llo_original>
// kernel: tpu_custom_call.1
$region0: #{tpu_custom_call.1}
  #allocation0 [shape = 'u32[]', space=smem, size = 0x4, offset = 0x4, fixed_abs, tag = 'smem constant byte address 0x4 - core index']
  #allocation1 [shape = 'u32[144,128]{1,0:T(1,128)}', space=vmem, size = 0x12000, scoped, tag = 'internal scratch']
  %s0 = inlined_call_operand.hbm [shape: f32[8,128], index: 0, kind: input, shape index: {}]
  %s1 = inlined_call_operand.hbm [shape: f32[8,128], index: 1, kind: input, shape index: {}]
  %s2 = inlined_call_operand.vmem [shape: f32[1,1,128], index: 2, kind: input, shape index: {}]
  %s3 = inlined_call_operand.vmem [shape: f32[1,1,128], index: 3, kind: input, shape index: {}]
  %s4 = inlined_call_operand.hbm [shape: f32[1,8,128], index: 4, kind: output, shape index: {}]
  %s5 = sld [smem:[#allocation0]]
  $region34: #{tpu_custom_call.1} parent=0
    _
  %s7 = ssub.s32 1, %s5
  %s8 = scalar_select 0, %s7, %s5
  $region1: #{tpu_custom_call.1} parent=0
    #allocation2 [shape = 'u8[4096]{0}', space=vmem, size = 0x1000, scoped, tag = 'input window, operand 0, single buffered']
    #allocation3 [shape = 's32[1]{0}', space=sflag, size = 0x4, scoped, tag = 'scoped memory for tpu_custom_call.1']
    #allocation4 [shape = 's32[1]{0}', space=sflag, size = 0x4, scoped, tag = 'scoped memory for tpu_custom_call.1']
    #allocation5 [shape = 'u8[4096]{0}', space=vmem, size = 0x1000, scoped, tag = 'input window, operand 1, single buffered']
    #allocation6 [shape = 's32[1]{0}', space=sflag, size = 0x4, scoped, tag = 'scoped memory for tpu_custom_call.1']
    #allocation7 [shape = 'u8[4096]{0}', space=vmem, size = 0x1000, scoped, tag = 'output window, operand 0, single buffered']
    %9 = vsyncpa [#allocation3], 0
    %10 = vsyncpa [#allocation6], 0
    %11 = vsyncpa [#allocation4], 0
    // Predicated region
    $region2: #{tpu_custom_call.1} parent=1 // pred_check
      _
    $region3: #{tpu_custom_call.1} parent=1 // pred_check_branch
      %13 = sbr.rel (0) target = $region5
    $region4: #{tpu_custom_call.1} parent=1 // pred_region
      %s15 = ssub.s32 128, 128
      %16 = vsyncadd [#allocation3], %s15
      %s18 = sshll.u32 [#allocation2], 4
      %s19 = int_to_ptr.vmem [resolvable:$true] %s18
      %21 = dma.hbm_to_vmem [thread:$0]  %s0, 128, %s19, [#allocation3]
    $region5: #{tpu_custom_call.1} parent=1 // pred_fallthru
      _
    // Predicated region
    $region6: #{tpu_custom_call.1} parent=1 // pred_check
      _
    $region7: #{tpu_custom_call.1} parent=1 // pred_check_branch
      %23 = sbr.rel (0) target = $region9
    $region8: #{tpu_custom_call.1} parent=1 // pred_region
      %s25 = ssub.s32 128, 128
      %26 = vsyncadd [#allocation6], %s25
      %s28 = sshll.u32 [#allocation5], 4
      %s29 = int_to_ptr.vmem [resolvable:$true] %s28
      %31 = dma.hbm_to_vmem [thread:$0]  %s1, 128, %s29, [#allocation6]
    $region9: #{tpu_custom_call.1} parent=1 // pred_fallthru
      _
    // Predicated region
    $region10: #{tpu_custom_call.1} parent=1 // pred_check
      _
    $region11: #{tpu_custom_call.1} parent=1 // pred_check_branch
      %33 = sbr.rel (0) target = $region13
    $region12: #{tpu_custom_call.1} parent=1 // pred_region
      _
    $region13: #{tpu_custom_call.1} parent=1 // pred_fallthru
      _
    // Predicated region
    $region14: #{tpu_custom_call.1} parent=1 // pred_check
      _
    $region15: #{tpu_custom_call.1} parent=1 // pred_check_branch
      %35 = sbr.rel (0) target = $region17
    $region16: #{tpu_custom_call.1} parent=1 // pred_region
      _
    $region17: #{tpu_custom_call.1} parent=1 // pred_fallthru
      _
    // Predicated region
    $region18: #{tpu_custom_call.1} parent=1 // pred_check
      _
    $region19: #{tpu_custom_call.1} parent=1 // pred_check_branch
      %37 = sbr.rel (0) target = $region21
    $region20: #{tpu_custom_call.1} parent=1 // pred_region
      %38 = dma.done [#allocation3], 128
    $region21: #{tpu_custom_call.1} parent=1 // pred_fallthru
      _
    // Predicated region
    $region22: #{tpu_custom_call.1} parent=1 // pred_check
      _
    $region23: #{tpu_custom_call.1} parent=1 // pred_check_branch
      %40 = sbr.rel (0) target = $region25
    $region24: #{tpu_custom_call.1} parent=1 // pred_region
      %41 = dma.done [#allocation6], 128
    $region25: #{tpu_custom_call.1} parent=1 // pred_fallthru
      _
    %v42 = vld [vmem:[%s2] sm:$0x1]
    %v43 = vld [vmem:[#allocation5] sm:$0xff]
    %v45 = vlaneseq
    %v46 = vshrl.u32 %v45, 7
    %v47 = vsub.s32 0, %v46
    %v48 = vrot.slane %v42, %v47
    %v50 = vmul.f32 %v48, %v43
    %v51 = vld [vmem:[%s3] sm:$0x1]
    %v52 = vld [vmem:[#allocation2] sm:$0xff]
    %v54 = vlaneseq
    %v55 = vshrl.u32 %v54, 7
    %v56 = vsub.s32 0, %v55
    %v57 = vrot.slane %v51, %v56
    %v59 = vmul.f32 %v57, %v52
    %v60 = vadd.f32 %v50, %v59
    %61 = vst [vmem:[#allocation7] sm:$0xff] %v60
    // Predicated region
    $region26: #{tpu_custom_call.1} parent=1 // pred_check
      _
    $region27: #{tpu_custom_call.1} parent=1 // pred_check_branch
      %63 = sbr.rel (0) target = $region29
    $region28: #{tpu_custom_call.1} parent=1 // pred_region
      %s65 = ssub.s32 128, 128
      %66 = vsyncadd [#allocation4], %s65
      %s68 = sshll.u32 [#allocation7], 4
      %s69 = int_to_ptr.vmem [resolvable:$true] %s68
      %71 = dma.vmem_to_hbm [thread:$0]  %s69, 128, %s4, [#allocation4]
    $region29: #{tpu_custom_call.1} parent=1 // pred_fallthru
      _
    // Predicated region
    $region30: #{tpu_custom_call.1} parent=1 // pred_check
      _
    $region31: #{tpu_custom_call.1} parent=1 // pred_check_branch
      %73 = sbr.rel (0) target = $region33
    $region32: #{tpu_custom_call.1} parent=1 // pred_region
      %74 = dma.done [#allocation4], 128
    $region33: #{tpu_custom_call.1} parent=1 // pred_fallthru
      _
    %75 = vsyncpa [#allocation3], 1
    %76 = vsyncpa [#allocation6], 1
    %77 = vsyncpa [#allocation4], 1

</llo_original>
